<compile_context>
chip_gen: v6e
topology: v6e:2x2x1
jax: 0.10.0
libtpu: 0.0.40
codegen_flags: <defaults>
</compile_context>

<pallas_src>
import jax
import jax.numpy as jnp
from jax.experimental import pallas as pl
from jax.experimental.pallas import tpu as pltpu


def _matmul_bias_kernel(x_ref, wt_ref, b_ref, o_ref, acc_ref):
    """One (tn x tk) @ (tk x tout) MXU step with f32 accumulation.

    Grid = (G, N_tiles, OUT_tiles, K_tiles); contraction axis (K) is last.
    x_ref:  (tn, tk)      input rows
    wt_ref: (tk, tout)    transposed weight block (so MXU does x @ W^T)
    b_ref:  (1, tout)     f32 bias row (broadcast over rows)
    o_ref:  (tn, tout)    output block
    acc_ref:(tn, tout)    f32 VMEM accumulator (resident across the K axis)
    """
    kk = pl.program_id(3)

    @pl.when(kk == 0)
    def _init():
        acc_ref[...] = jnp.zeros_like(acc_ref)

    acc_ref[...] += jnp.dot(x_ref[...], wt_ref[...],
                            preferred_element_type=jnp.float32)

    @pl.when(kk == pl.num_programs(3) - 1)
    def _finalize():
        o_ref[...] = (acc_ref[...] + b_ref[...]).astype(o_ref.dtype)


def _round_up(x, m):
    return ((x + m - 1) // m) * m


def _pick_lane_tile(dim, cap=512):
    """Tile for a lane (last) dim: a multiple of 128 that divides `dim`, or the full dim."""
    if dim <= cap:
        return dim
    for t in (cap, 384, 256, 128):
        if dim % t == 0:
            return t
    return dim


def fused_in_projection(xs, ws, bs, *, tile_n=256, out_dtype=None):
    """Computes y_g = x_g @ w_g^T + b_g for every group g in ONE pallas_call.

    xs: list of (N_g, E) inputs (rows are zero-padded to a common count)
    ws: list of (E_out, E) weights
    bs: list of (E_out,) biases
    Returns a list of (N_g, E_out) outputs.
    """
    G = len(xs)
    E = xs[0].shape[1]
    E_out = ws[0].shape[0]
    out_dtype = out_dtype or xs[0].dtype

    # Row tile (second-to-last dim): multiple of 16 keeps bf16-friendly layouts too.
    n_max = max(x.shape[0] for x in xs)
    tn = min(tile_n, _round_up(n_max, 16))
    n_pad = _round_up(n_max, tn)

    # Lane-dim tiles: multiple of 128, or the full dim for small embeddings.
    tk = _pick_lane_tile(E)
    tout = _pick_lane_tile(E_out)

    # Stack padded inputs into (G, n_pad, E); padded rows only ever see the bias
    # and are sliced away below, so zero-padding is semantically free.
    xg = jnp.stack(
        [jnp.pad(x, ((0, n_pad - x.shape[0]), (0, 0))) for x in xs], axis=0)
    # Pre-transpose weights so the kernel computes x @ W^T directly: (G, E, E_out).
    wtg = jnp.stack([w.T for w in ws], axis=0)
    # Bias as f32 rows (G, 1, E_out): no per-iteration cast inside the kernel.
    bg = jnp.stack([b.reshape(1, E_out).astype(jnp.float32) for b in bs], axis=0)

    grid = (G, n_pad // tn, E_out // tout, E // tk)

    # NOTE: double-buffered VMEM footprint is
    #   2*(tn*tk + tk*tout + tn*tout)*itemsize + tn*tout*4  <~ 6 MiB
    # for the largest tile choice, which fits the default scoped VMEM on
    # v5e (16 MiB), v6e (32 MiB) and v7x (32 MiB scoped / 64 MiB physical).
    # TODO(synk): optionally cast x/W to bf16 on v6e/v7x for ~4x MXU throughput
    # (f32 accumulation kept); left off here to preserve f32 reference accuracy.
    out = pl.pallas_call(
        _matmul_bias_kernel,
        out_shape=jax.ShapeDtypeStruct((G, n_pad, E_out), out_dtype),
        grid_spec=pltpu.PrefetchScalarGridSpec(
            num_scalar_prefetch=0,
            grid=grid,
            in_specs=[
                # x tile: group g, row block i, contraction block kk
                pl.BlockSpec((None, tn, tk), lambda g, i, j, kk: (g, i, kk)),
                # W^T tile: group g, contraction block kk, output block j
                pl.BlockSpec((None, tk, tout), lambda g, i, j, kk: (g, kk, j)),
                # bias row: group g, output block j
                pl.BlockSpec((None, 1, tout), lambda g, i, j, kk: (g, 0, j)),
            ],
            out_specs=pl.BlockSpec((None, tn, tout),
                                   lambda g, i, j, kk: (g, i, j)),
            scratch_shapes=[pltpu.VMEM((tn, tout), jnp.float32)],
        ),
        compiler_params=pltpu.CompilerParams(
            dimension_semantics=("parallel", "parallel", "parallel", "arbitrary"),
        ),
    )(xg, wtg, bg)

    return [out[g, :xs[g].shape[0], :] for g in range(G)]


class InProjContainerPallas:
    """JAX/Pallas equivalent of the PyTorch InProjContainer (packed weights)."""

    def __init__(self, in_proj_weight, in_proj_bias, shared_qk=False):
        # in_proj_weight: (3E, E)  packed [w_q; w_k; w_v]
        # in_proj_bias:   (3E,)    packed [b_q; b_k; b_v]
        self.in_proj_weight = in_proj_weight
        self.in_proj_bias = in_proj_bias
        self.shared_qk = shared_qk

    def __call__(self, q, k, v):
        E = self.in_proj_weight.shape[0] // 3
        w = self.in_proj_weight
        b = self.in_proj_bias

        def flat(x):
            L, B, Ein = x.shape
            return x.reshape(L * B, Ein), (L, B)

        if (not self.shared_qk) and (q is k) and (k is v):
            # Self-attention fast path: one (N, E) x (E, 3E) matmul (lane-dense
            # 3E-wide output), then chunk — mirrors _in_projection_packed.
            x2d, (L, B) = flat(q)
            (y,) = fused_in_projection([x2d], [w], [b])
            q_p, k_p, v_p = jnp.split(y, 3, axis=-1)
            return (q_p.reshape(L, B, E),
                    k_p.reshape(L, B, E),
                    v_p.reshape(L, B, E))

        w_q, w_k, w_v = w[:E], w[E:2 * E], w[2 * E:]
        b_q, b_k, b_v = b[:E], b[E:2 * E], b[2 * E:]
        if self.shared_qk:
            # TODO(synk): the original packed shared_qk uses a (2E, E) weight layout;
            # we only model the simplified "reuse q weights for k" behaviour here.
            w_k, b_k = w_q, b_q

        qx, qs = flat(q)
        kx, ks = flat(k)
        vx, vs = flat(v)
        yq, yk, yv = fused_in_projection(
            [qx, kx, vx], [w_q, w_k, w_v], [b_q, b_k, b_v])
        return (yq.reshape(qs[0], qs[1], E),
                yk.reshape(ks[0], ks[1], E),
                yv.reshape(vs[0], vs[1], E))


if __name__ == "__main__":
    # Small deterministic example: seq len 8, batch=2, embed=32.
    key = jax.random.PRNGKey(0)
    k_w, k_b, k_q, k_k, k_v = jax.random.split(key, 5)

    embed_dim = 32
    bsz = 2
    seq_q = 8
    seq_kv = 8

    # Xavier-uniform-like deterministic init for packed in_proj weight/bias.
    limit = (6.0 / (embed_dim + embed_dim)) ** 0.5
    in_proj_weight = jax.random.uniform(
        k_w, (3 * embed_dim, embed_dim), jnp.float32, -limit, limit)
    in_proj_bias = jax.random.uniform(
        k_b, (3 * embed_dim,), jnp.float32, -0.1, 0.1)

    q = jax.random.normal(k_q, (seq_q, bsz, embed_dim), jnp.float32)
    k = jax.random.normal(k_k, (seq_kv, bsz, embed_dim), jnp.float32)
    v = jax.random.normal(k_v, (seq_kv, bsz, embed_dim), jnp.float32)

    container = InProjContainerPallas(in_proj_weight, in_proj_bias, shared_qk=False)

    # Pure-JAX reference (F.linear semantics: x @ W^T + b).
    E = embed_dim

    def ref_lin(x, wmat, bvec):
        return jnp.einsum("lbe,oe->lbo", x, wmat) + bvec

    # --- General (encoder-decoder style) path: distinct q, k, v -> fused G=3 call.
    q_p, k_p, v_p = container(q, k, v)
    jax.block_until_ready((q_p, k_p, v_p))

    q_ref = ref_lin(q, in_proj_weight[:E], in_proj_bias[:E])
    k_ref = ref_lin(k, in_proj_weight[E:2 * E], in_proj_bias[E:2 * E])
    v_ref = ref_lin(v, in_proj_weight[2 * E:], in_proj_bias[2 * E:])

    assert q_p.shape == (seq_q, bsz, embed_dim)
    assert k_p.shape == (seq_kv, bsz, embed_dim)
    assert v_p.shape == (seq_kv, bsz, embed_dim)
    assert jnp.allclose(q_p, q_ref, atol=1e-5)
    assert jnp.allclose(k_p, k_ref, atol=1e-5)
    assert jnp.allclose(v_p, v_ref, atol=1e-5)

    # --- Self-attention fast path: q is k is v -> single packed (N, 3E) matmul.
    qs_p, ks_p, vs_p = container(q, q, q)
    jax.block_until_ready((qs_p, ks_p, vs_p))

    qs_ref = ref_lin(q, in_proj_weight[:E], in_proj_bias[:E])
    ks_ref = ref_lin(q, in_proj_weight[E:2 * E], in_proj_bias[E:2 * E])
    vs_ref = ref_lin(q, in_proj_weight[2 * E:], in_proj_bias[2 * E:])

    assert jnp.allclose(qs_p, qs_ref, atol=1e-5)
    assert jnp.allclose(ks_p, ks_ref, atol=1e-5)
    assert jnp.allclose(vs_p, vs_ref, atol=1e-5)

    print("KERNEL_OK")
</pallas_src>

<mosaic_0001>
module attributes {stable_mosaic.version = 11 : i64} {
  func.func @_matmul_bias_kernel(%arg0: i32, %arg1: i32, %arg2: i32, %arg3: i32, %arg4: memref<1x16x32xf32, #tpu.memory_space<vmem>>, %arg5: memref<1x32x32xf32, #tpu.memory_space<vmem>>, %arg6: memref<1x1x32xf32, #tpu.memory_space<vmem>>, %arg7: memref<1x16x32xf32, #tpu.memory_space<vmem>>, %arg8: memref<16x32xf32, #tpu.memory_space<vmem>>) attributes {dimension_semantics = [#tpu.dimension_semantics<parallel>, #tpu.dimension_semantics<parallel>, #tpu.dimension_semantics<parallel>, #tpu.dimension_semantics<arbitrary>], iteration_bounds = array<i64: 3, 1, 1, 1>, scalar_prefetch = 0 : i64, scratch_operands = 1 : i64, tpu.core_type = #tpu.core_type<tc>, window_params = [{transform_indices = @transform_0, window_bounds = array<i64: 1, 16, 32>}, {transform_indices = @transform_1, window_bounds = array<i64: 1, 32, 32>}, {transform_indices = @transform_2, window_bounds = array<i64: 1, 1, 32>}, {transform_indices = @transform_3, window_bounds = array<i64: 1, 16, 32>}]} {
    %c0_i32 = arith.constant 0 : i32
    %0 = arith.cmpi eq, %arg3, %c0_i32 : i32
    %1 = arith.extui %0 : i1 to i32
    %c0_i32_0 = arith.constant 0 : i32
    %2 = arith.cmpi ne, %1, %c0_i32_0 : i32
    scf.if %2 {
      %cst_12 = arith.constant 0.000000e+00 : f32
      %14 = vector.broadcast %cst_12 : f32 to vector<16x32xf32>
      %c0_13 = arith.constant 0 : index
      %c0_14 = arith.constant 0 : index
      %15 = vector.load %arg8[%c0_13, %c0_14] : memref<16x32xf32, #tpu.memory_space<vmem>>, vector<16x32xf32>
      tpu.vector_store %arg8[%c0_13, %c0_14], %14 {strides = array<i32>} : memref<16x32xf32, #tpu.memory_space<vmem>>, vector<16x32xf32>,
    } else {
    }
    %c0 = arith.constant 0 : index
    %c0_1 = arith.constant 0 : index
    %3 = vector.load %arg8[%c0, %c0_1] : memref<16x32xf32, #tpu.memory_space<vmem>>, vector<16x32xf32>
    %c0_2 = arith.constant 0 : index
    %c0_3 = arith.constant 0 : index
    %c0_4 = arith.constant 0 : index
    %4 = vector.load %arg4[%c0_2, %c0_3, %c0_4] : memref<1x16x32xf32, #tpu.memory_space<vmem>>, vector<1x16x32xf32>
    %5 = vector.shape_cast %4 : vector<1x16x32xf32> to vector<16x32xf32>
    %c0_5 = arith.constant 0 : index
    %c0_6 = arith.constant 0 : index
    %c0_7 = arith.constant 0 : index
    %6 = vector.load %arg5[%c0_5, %c0_6, %c0_7] : memref<1x32x32xf32, #tpu.memory_space<vmem>>, vector<1x32x32xf32>
    %7 = vector.shape_cast %6 : vector<1x32x32xf32> to vector<32x32xf32>
    %cst = arith.constant dense<0.000000e+00> : vector<16x32xf32>
    %8 = tpu.matmul %5, %7, %cst {dimension_numbers = #tpu.dot_dimension_numbers<[1], [0], [0], [1], [0, 0, 1, 1], [], []>} : vector<16x32xf32>, vector<32x32xf32>, vector<16x32xf32> -> vector<16x32xf32>
    %9 = arith.addf %3, %8 : vector<16x32xf32>
    %c0_8 = arith.constant 0 : index
    %c0_9 = arith.constant 0 : index
    %10 = vector.load %arg8[%c0_8, %c0_9] : memref<16x32xf32, #tpu.memory_space<vmem>>, vector<16x32xf32>
    tpu.vector_store %arg8[%c0_8, %c0_9], %9 {strides = array<i32>} : memref<16x32xf32, #tpu.memory_space<vmem>>, vector<16x32xf32>,
    %c0_i32_10 = arith.constant 0 : i32
    %11 = arith.cmpi eq, %arg3, %c0_i32_10 : i32
    %12 = arith.extui %11 : i1 to i32
    %c0_i32_11 = arith.constant 0 : i32
    %13 = arith.cmpi ne, %12, %c0_i32_11 : i32
    scf.if %13 {
      %c0_12 = arith.constant 0 : index
      %c0_13 = arith.constant 0 : index
      %14 = vector.load %arg8[%c0_12, %c0_13] : memref<16x32xf32, #tpu.memory_space<vmem>>, vector<16x32xf32>
      %c0_14 = arith.constant 0 : index
      %c0_15 = arith.constant 0 : index
      %c0_16 = arith.constant 0 : index
      %15 = vector.load %arg6[%c0_14, %c0_15, %c0_16] : memref<1x1x32xf32, #tpu.memory_space<vmem>>, vector<1x1x32xf32>
      %16 = vector.shape_cast %15 : vector<1x1x32xf32> to vector<1x32xf32>
      %17 = vector.broadcast %16 : vector<1x32xf32> to vector<16x32xf32>
      %18 = arith.addf %14, %17 : vector<16x32xf32>
      %c0_17 = arith.constant 0 : index
      %c0_18 = arith.constant 0 : index
      %c0_19 = arith.constant 0 : index
      %19 = vector.load %arg7[%c0_17, %c0_18, %c0_19] : memref<1x16x32xf32, #tpu.memory_space<vmem>>, vector<1x16x32xf32>
      %20 = vector.shape_cast %19 : vector<1x16x32xf32> to vector<16x32xf32>
      %21 = vector.shape_cast %18 : vector<16x32xf32> to vector<1x16x32xf32>
      tpu.vector_store %arg7[%c0_17, %c0_18, %c0_19], %21 {strides = array<i32>} : memref<1x16x32xf32, #tpu.memory_space<vmem>>, vector<1x16x32xf32>,
    } else {
    }
    return
  }
  func.func @transform_0(%arg0: i32, %arg1: i32, %arg2: i32, %arg3: i32) -> (i32, i32, i32) {
    %c0_i32 = arith.constant 0 : i32
    return %arg0, %arg1, %arg3 : i32, i32, i32
  }
  func.func @transform_1(%arg0: i32, %arg1: i32, %arg2: i32, %arg3: i32) -> (i32, i32, i32) {
    %c0_i32 = arith.constant 0 : i32
    return %arg0, %arg3, %arg2 : i32, i32, i32
  }
  func.func @transform_2(%arg0: i32, %arg1: i32, %arg2: i32, %arg3: i32) -> (i32, i32, i32) {
    %c0_i32 = arith.constant 0 : i32
    %c0_i32_0 = arith.constant 0 : i32
    return %arg0, %c0_i32, %arg2 : i32, i32, i32
  }
  func.func @transform_3(%arg0: i32, %arg1: i32, %arg2: i32, %arg3: i32) -> (i32, i32, i32) {
    %c0_i32 = arith.constant 0 : i32
    return %arg0, %arg1, %arg2 : i32, i32, i32
  }
}

</mosaic_0001>

<llo_original>
// kernel: tpu_custom_call.1
$region0: #{tpu_custom_call.1}
  #allocation0 [shape = 'u32[]', space=smem, size = 0x4, offset = 0x4, fixed_abs, tag = 'smem constant byte address 0x4 - core index']
  #allocation1 [shape = 'u32[144,128]{1,0:T(1,128)}', space=vmem, size = 0x12000, scoped, tag = 'internal scratch']
  #allocation2 [shape = 'f32[16,32]{1,0:T(8,128)}', space=vmem, size = 0x2000, scoped, tag = 'scratch operand']
  %s0 = inlined_call_operand.hbm [shape: f32[3,16,32], index: 0, kind: input, shape index: {}]
  %s1 = inlined_call_operand.hbm [shape: f32[3,32,32], index: 1, kind: input, shape index: {}]
  %s2 = inlined_call_operand.vmem [shape: f32[3,1,32], index: 2, kind: input, shape index: {}]
  %s3 = inlined_call_operand.hbm [shape: f32[3,16,32], index: 3, kind: output, shape index: {}]
  %s4 = sld [smem:[#allocation0]]
  $region61: #{tpu_custom_call.1} parent=0
    _
  %s6 = ssub.s32 1, %s4
  %s7 = scalar_select 0, %s6, %s4
  $region1: #{tpu_custom_call.1} parent=0
    #allocation3 [shape = 'u8[16384]{0}', space=vmem, size = 0x4000, scoped, tag = 'input window, operand 0']
    #allocation4 [shape = 's32[2]{0}', space=sflag, size = 0x8, scoped, tag = 'scoped memory for tpu_custom_call.1']
    #allocation5 [shape = 's32[2]{0}', space=sflag, size = 0x8, scoped, tag = 'scoped memory for tpu_custom_call.1']
    #allocation6 [shape = 'u8[32768]{0}', space=vmem, size = 0x8000, scoped, tag = 'input window, operand 1']
    #allocation7 [shape = 's32[2]{0}', space=sflag, size = 0x8, scoped, tag = 'scoped memory for tpu_custom_call.1']
    #allocation8 [shape = 'u8[16384]{0}', space=vmem, size = 0x4000, scoped, tag = 'output window, operand 0']
    %8 = vsyncpa [#allocation4], 0
    %s9 = scalar_lea.sflag [#allocation4], 1
    %10 = vsyncpa %s9, 0
    %11 = vsyncpa [#allocation7], 0
    %s12 = scalar_lea.sflag [#allocation7], 1
    %13 = vsyncpa %s12, 0
    %14 = vsyncpa [#allocation5], 0
    %s15 = scalar_lea.sflag [#allocation5], 1
    %16 = vsyncpa %s15, 0
    loop: start=0, step=1, limit=5
    $region2: #{tpu_custom_call.1} parent=1 // loop_pre_header
      _
    $region3: #{tpu_custom_call.1} parent=1 // loop_header
      %s18 = sphi 0, %s22
      %p19 = scmp.ge.s32.totalorder %s18, 5
      %s25 = sphi 0, %s51
      %s26 = sphi 0, %s47
      %s27 = sphi 0, %s43
      %s28 = sphi 0, %s39
      %s29 = sphi 0, %s25
      %s30 = sphi 0, %s26
      %s31 = sphi 0, %s27
      %s32 = sphi 0, %s28
      %s33 = sphi 0, %s29
      %s34 = sphi 0, %s30
      %s35 = sphi 0, %s31
      %s36 = sphi 0, %s32
      %s58 = sphi 0, %s60
      %s61 = sphi 0, %s58
      %s62 = sphi 0, %s61
      %s78 = sphi 0, %s62
      %s88 = sphi 0, %s90
      %s91 = sphi 0, %s88
      %s92 = sphi 0, %s91
      %s108 = sphi 0, %s92
      %s116 = sphi 0, %s118
      %s119 = sphi 0, %s116
      %s120 = sphi 0, %s119
      %s136 = sphi 0, %s120
      %s146 = sphi 0, %s148
      %s149 = sphi 0, %s146
      %s150 = sphi 0, %s149
      %s166 = sphi 0, %s150
    $region4: #{tpu_custom_call.1} parent=1 // loop_header_branch
      %21 = sbr.rel (%p19) target = $region8
    $region5: #{tpu_custom_call.1} parent=1 // loop_body
      %s23 = ssub.s32 %s18, 1
      %s24 = ssub.s32 %s18, 2
      %s37 = sadd.s32 1, %s28
      %p38 = scmp.ge.s32.totalorder %s37, 1
      %s39 = scalar_select %p38, 0, %s37
      %s40 = sadd.s32 1, %s27
      %s41 = scalar_select %p38, %s40, %s27
      %p42 = scmp.ge.s32.totalorder %s41, 1
      %s43 = scalar_select %p42, 0, %s41
      %s44 = sadd.s32 1, %s26
      %s45 = scalar_select %p42, %s44, %s26
      %p46 = scmp.ge.s32.totalorder %s45, 1
      %s47 = scalar_select %p46, 0, %s45
      %s48 = sadd.s32 1, %s25
      %s49 = scalar_select %p46, %s48, %s25
      %p50 = scmp.ge.s32.totalorder %s49, 3
      %s51 = scalar_select %p50, 0, %s49
      %s52 = ssub.s32 %s25, %s51
      %s53 = ssub.s32 %s26, %s47
      %s54 = sor.u32 %s52, %s53
      %s55 = ssub.s32 %s28, %s39
      %s56 = sor.u32 %s54, %s55
      %p57 = scmp.eq.s32.totalorder %s56, 0
      %s59 = sadd.s32 %s58, 1
      %s60 = scalar_select %p57, %s58, %s59
      %p63 = pneg %p57
      %p64 = scmp.eq.s32.totalorder %s18, 2
      %p65 = por %p63, %p64
      %p66 = scmp.ne.s32.totalorder %s58, %s61
      %p67 = scmp.eq.s32.totalorder %s18, 0
      %p68 = por %p66, %p67
      %p69 = scmp.ne.s32.totalorder %s58, %s61
      %p70 = scmp.eq.s32.totalorder %s23, 2
      %p71 = por %p69, %p70
      %p72 = scmp.ne.s32.totalorder %s61, %s62
      %p73 = scmp.eq.s32.totalorder %s23, 0
      %p74 = por %p72, %p73
      %p75 = scmp.ne.s32.totalorder %s61, %s62
      %p76 = scmp.eq.s32.totalorder %s24, 2
      %p77 = por %p75, %p76
      %p79 = scmp.ne.s32.totalorder %s62, %s78
      %p80 = scmp.eq.s32.totalorder %s24, 0
      %p81 = por %p79, %p80
      %s82 = ssub.s32 %s25, %s51
      %s83 = ssub.s32 %s28, %s39
      %s84 = sor.u32 %s82, %s83
      %s85 = ssub.s32 %s27, %s43
      %s86 = sor.u32 %s84, %s85
      %p87 = scmp.eq.s32.totalorder %s86, 0
      %s89 = sadd.s32 %s88, 1
      %s90 = scalar_select %p87, %s88, %s89
      %p93 = pneg %p87
      %p94 = scmp.eq.s32.totalorder %s18, 2
      %p95 = por %p93, %p94
      %p96 = scmp.ne.s32.totalorder %s88, %s91
      %p97 = scmp.eq.s32.totalorder %s18, 0
      %p98 = por %p96, %p97
      %p99 = scmp.ne.s32.totalorder %s88, %s91
      %p100 = scmp.eq.s32.totalorder %s23, 2
      %p101 = por %p99, %p100
      %p102 = scmp.ne.s32.totalorder %s91, %s92
      %p103 = scmp.eq.s32.totalorder %s23, 0
      %p104 = por %p102, %p103
      %p105 = scmp.ne.s32.totalorder %s91, %s92
      %p106 = scmp.eq.s32.totalorder %s24, 2
      %p107 = por %p105, %p106
      %p109 = scmp.ne.s32.totalorder %s92, %s108
      %p110 = scmp.eq.s32.totalorder %s24, 0
      %p111 = por %p109, %p110
      %s112 = ssub.s32 %s25, %s51
      %s113 = ssub.s32 %s27, %s43
      %s114 = sor.u32 %s112, %s113
      %p115 = scmp.eq.s32.totalorder %s114, 0
      %s117 = sadd.s32 %s116, 1
      %s118 = scalar_select %p115, %s116, %s117
      %p121 = pneg %p115
      %p122 = scmp.eq.s32.totalorder %s18, 2
      %p123 = por %p121, %p122
      %p124 = scmp.ne.s32.totalorder %s116, %s119
      %p125 = scmp.eq.s32.totalorder %s18, 0
      %p126 = por %p124, %p125
      %p127 = scmp.ne.s32.totalorder %s116, %s119
      %p128 = scmp.eq.s32.totalorder %s23, 2
      %p129 = por %p127, %p128
      %p130 = scmp.ne.s32.totalorder %s119, %s120
      %p131 = scmp.eq.s32.totalorder %s23, 0
      %p132 = por %p130, %p131
      %p133 = scmp.ne.s32.totalorder %s119, %s120
      %p134 = scmp.eq.s32.totalorder %s24, 2
      %p135 = por %p133, %p134
      %p137 = scmp.ne.s32.totalorder %s120, %s136
      %p138 = scmp.eq.s32.totalorder %s24, 0
      %p139 = por %p137, %p138
      %s140 = ssub.s32 %s25, %s51
      %s141 = ssub.s32 %s26, %s47
      %s142 = sor.u32 %s140, %s141
      %s143 = ssub.s32 %s27, %s43
      %s144 = sor.u32 %s142, %s143
      %p145 = scmp.eq.s32.totalorder %s144, 0
      %s147 = sadd.s32 %s146, 1
      %s148 = scalar_select %p145, %s146, %s147
      %p151 = pneg %p145
      %p152 = scmp.eq.s32.totalorder %s18, 2
      %p153 = por %p151, %p152
      %p154 = scmp.ne.s32.totalorder %s146, %s149
      %p155 = scmp.eq.s32.totalorder %s18, 0
      %p156 = por %p154, %p155
      %p157 = scmp.ne.s32.totalorder %s146, %s149
      %p158 = scmp.eq.s32.totalorder %s23, 2
      %p159 = por %p157, %p158
      %p160 = scmp.ne.s32.totalorder %s149, %s150
      %p161 = scmp.eq.s32.totalorder %s23, 0
      %p162 = por %p160, %p161
      %p163 = scmp.ne.s32.totalorder %s149, %s150
      %p164 = scmp.eq.s32.totalorder %s24, 2
      %p165 = por %p163, %p164
      %p167 = scmp.ne.s32.totalorder %s150, %s166
      %p168 = scmp.eq.s32.totalorder %s24, 0
      %p169 = por %p167, %p168
      %p170 = scmp.le.s32.totalorder 1, %s18
      %p171 = scmp.lt.s32.totalorder %s18, 4
      %p172 = pnand %p170, %p171
      %p173 = pneg %p172
      // Predicated region
      $region9: #{tpu_custom_call.1} parent=5 // pred_check
        _
      $region10: #{tpu_custom_call.1} parent=5 // pred_check_branch
        %175 = sbr.rel (%p172) target = $region12
      $region11: #{tpu_custom_call.1} parent=5 // pred_region
        %s176 = ssub.s32 %s18, 1
      $region12: #{tpu_custom_call.1} parent=5 // pred_fallthru
        _
      %p177 = scmp.lt.s32.totalorder %s18, 3
      // Predicated region
      $region13: #{tpu_custom_call.1} parent=5 // pred_check
        %p178 = pneg %p177
      $region14: #{tpu_custom_call.1} parent=5 // pred_check_branch
        %180 = sbr.rel (%p178) target = $region16
      $region15: #{tpu_custom_call.1} parent=5 // pred_region
        // Predicated region
        $region17: #{tpu_custom_call.1} parent=15 // pred_check
          %p181 = pneg %p68
        $region18: #{tpu_custom_call.1} parent=15 // pred_check_branch
          %183 = sbr.rel (%p181) target = $region20
        $region19: #{tpu_custom_call.1} parent=15 // pred_region
          %s184 = sand.u32 %s58, 1
          %s185 = scalar_lea.sflag [#allocation4], %s184
          %s186 = sand.u32 %s58, 1
          %s187 = smul.addr %s186, 16
          %s188 = scalar_lea.vmem [#allocation3], %s187
          %s189 = smul.u32 2, %s26
          %s191 = ssub.s32 256, 256
          %192 = vsyncadd %s185, %s191
          %s193 = sadd.s32 %s28, %s189
          %s194 = smul.addr %s25, 2
          %s195 = sadd.s32 %s193, %s194
          %s196 = smul.addr %s195, 128
          %s197 = scalar_lea.hbm %s0, %s196
          %s198 = sshll.u32 %s188, 4
          %s199 = int_to_ptr.vmem [resolvable:$true] %s198
          %204 = dma.hbm_to_vmem [thread:$0]  %s197, 256, %s199, %s185, 128, 128, 8
        $region20: #{tpu_custom_call.1} parent=15 // pred_fallthru
          _
        // Predicated region
        $region21: #{tpu_custom_call.1} parent=15 // pred_check
          %p205 = pneg %p98
        $region22: #{tpu_custom_call.1} parent=15 // pred_check_branch
          %207 = sbr.rel (%p205) target = $region24
        $region23: #{tpu_custom_call.1} parent=15 // pred_region
          %s208 = sand.u32 %s88, 1
          %s209 = scalar_lea.sflag [#allocation7], %s208
          %s210 = sand.u32 %s88, 1
          %s211 = smul.addr %s210, 32
          %s212 = scalar_lea.vmem [#allocation6], %s211
          %s213 = smul.u32 4, %s28
          %s215 = ssub.s32 512, 512
          %216 = vsyncadd %s209, %s215
          %s217 = sadd.s32 %s27, %s213
          %s218 = smul.addr %s25, 4
          %s219 = sadd.s32 %s217, %s218
          %s220 = smul.addr %s219, 128
          %s221 = scalar_lea.hbm %s1, %s220
          %s222 = sshll.u32 %s212, 4
          %s223 = int_to_ptr.vmem [resolvable:$true] %s222
          %228 = dma.hbm_to_vmem [thread:$0]  %s221, 512, %s223, %s209, 128, 128, 8
        $region24: #{tpu_custom_call.1} parent=15 // pred_fallthru
          _
        // Predicated region
        $region25: #{tpu_custom_call.1} parent=15 // pred_check
          %p229 = pneg %p126
        $region26: #{tpu_custom_call.1} parent=15 // pred_check_branch
          %231 = sbr.rel (%p229) target = $region28
        $region27: #{tpu_custom_call.1} parent=15 // pred_region
          %p232 = scmp.lt.s32.totalorder %s25, 2
          %s233 = scalar_select %p232, %s25, 2
          %p234 = scmp.lt.s32.totalorder %s27, 0
          %s235 = scalar_select %p234, %s27, 0
          %s236 = sadd.s32 %s235, %s233
          %s237 = scalar_lea.vmem %s2, %s236
        $region28: #{tpu_custom_call.1} parent=15 // pred_fallthru
          _
      $region16: #{tpu_custom_call.1} parent=5 // pred_fallthru
        _
      %p238 = scmp.le.s32.totalorder 1, %s18
      %p239 = scmp.lt.s32.totalorder %s18, 4
      %p240 = pnand %p238, %p239
      %p241 = pneg %p240
      // Predicated region
      $region29: #{tpu_custom_call.1} parent=5 // pred_check
        _
      $region30: #{tpu_custom_call.1} parent=5 // pred_check_branch
        %243 = sbr.rel (%p240) target = $region32
      $region31: #{tpu_custom_call.1} parent=5 // pred_region
        %s244 = ssub.s32 %s18, 1
        %s245 = sand.u32 %s61, 1
        %s246 = scalar_lea.sflag [#allocation4], %s245
        %s247 = sand.u32 %s61, 1
        %s248 = smul.addr %s247, 16
        %s249 = scalar_lea.vmem [#allocation3], %s248
        // Predicated region
        $region33: #{tpu_custom_call.1} parent=31 // pred_check
          %p250 = pneg %p74
        $region34: #{tpu_custom_call.1} parent=31 // pred_check_branch
          %252 = sbr.rel (%p250) target = $region36
        $region35: #{tpu_custom_call.1} parent=31 // pred_region
          %253 = dma.done %s246, 256
        $region36: #{tpu_custom_call.1} parent=31 // pred_fallthru
          _
        %s254 = sand.u32 %s91, 1
        %s255 = scalar_lea.sflag [#allocation7], %s254
        %s256 = sand.u32 %s91, 1
        %s257 = smul.addr %s256, 32
        %s258 = scalar_lea.vmem [#allocation6], %s257
        // Predicated region
        $region37: #{tpu_custom_call.1} parent=31 // pred_check
          %p259 = pneg %p104
        $region38: #{tpu_custom_call.1} parent=31 // pred_check_branch
          %261 = sbr.rel (%p259) target = $region40
        $region39: #{tpu_custom_call.1} parent=31 // pred_region
          %262 = dma.done %s255, 512
        $region40: #{tpu_custom_call.1} parent=31 // pred_fallthru
          _
        %s263 = sand.u32 %s61, 1
        %s264 = scalar_lea.sflag [#allocation4], %s263
        %s265 = sand.u32 %s61, 1
        %s266 = smul.addr %s265, 16
        %s267 = scalar_lea.vmem [#allocation3], %s266
        %p268 = pneg %p74
        %p269 = pneg %p71
        %s270 = sand.u32 %s91, 1
        %s271 = scalar_lea.sflag [#allocation7], %s270
        %s272 = sand.u32 %s91, 1
        %s273 = smul.addr %s272, 32
        %s274 = scalar_lea.vmem [#allocation6], %s273
        %p275 = pneg %p104
        %p276 = pneg %p101
        %p277 = scmp.lt.s32.totalorder %s29, 2
        %s278 = scalar_select %p277, %s29, 2
        %p279 = scmp.lt.s32.totalorder %s31, 0
        %s280 = scalar_select %p279, %s31, 0
        %s281 = sadd.s32 %s280, %s278
        %s282 = scalar_lea.vmem %s2, %s281
        %p283 = pneg %p132
        %p284 = pneg %p129
        %p285 = pneg %p162
        %p286 = pneg %p159
        %s287 = sand.u32 %s149, 1
        %s288 = scalar_lea.sflag [#allocation5], %s287
        %s289 = sand.u32 %s149, 1
        %s290 = smul.addr %s289, 16
        %s291 = scalar_lea.vmem [#allocation8], %s290
        %s292 = smul.u32 2, %s30
        %s293 = smul.u32 4, %s32
        %p294 = scmp.lt.s32.totalorder %s29, 2
        %s295 = scalar_select %p294, %s29, 2
        %p296 = scmp.lt.s32.totalorder %s31, 0
        %s297 = scalar_select %p296, %s31, 0
        %s298 = sadd.s32 %s297, %s295
        %s299 = scalar_lea.vmem %s2, %s298
        %s300 = smul.u32 2, %s30
        %p301 = scmp.eq.s32.totalorder %s32, 0
        // Predicated region
        $region41: #{tpu_custom_call.1} parent=31 // pred_check
          %p302 = pneg %p301
        $region42: #{tpu_custom_call.1} parent=31 // pred_check_branch
          %304 = sbr.rel (%p302) target = $region44
        $region43: #{tpu_custom_call.1} parent=31 // pred_region
          %vm305 = vcmask 261120
          %306 = vst.msk [vmem:[#allocation2] sm:$0xff] %vm305, 0.0
          %307 = vst.msk [vmem:[#allocation2 + $0x8] sm:$0xff] %vm305, 0.0
        $region44: #{tpu_custom_call.1} parent=31 // pred_fallthru
          _
        %v308 = vld [vmem:[#allocation2] sm:$0xff]
        %v309 = vld [vmem:[#allocation2 + $0x8] sm:$0xff]
        %v310 = vld [vmem:[%s249] sm:$0xff]
        %v311 = vld [vmem:[%s249 + $0x8] sm:$0xff]
        %v312 = vld [vmem:[%s258] sm:$0xff]
        %v313 = vld [vmem:[%s258 + $0x8] sm:$0xff]
        %v314 = vld [vmem:[%s258 + $0x10] sm:$0xff]
        %v315 = vld [vmem:[%s258 + $0x18] sm:$0xff]
        %vm316 = vcmask 261120
        %v318 = vsel %vm316, %v310, 0
        %v321 = vsel %vm316, %v311, 0
        %323 = vmatprep.subr.mxu0 0.0
        %324 = vmatpush1.msra.mxu0 0.0
        %325 = vmatprep.subr.mxu0 0.0
        %326 = vmatpush1.msra.mxu0 0.0
        %327 = vmatprep.subr.mxu0 0.0
        %328 = vmatpush1.msra.mxu0 0.0
        %329 = vmatprep.subr.mxu0 0.0
        %330 = vmatpush1.msra.mxu0 0.0
        %331 = vmatprep.subr.mxu0 0.0
        %332 = vmatpush1.msra.mxu0 0.0
        %333 = vmatprep.subr.mxu0 0.0
        %334 = vmatpush1.msra.mxu0 0.0
        %335 = vmatprep.subr.mxu0 0.0
        %336 = vmatpush1.msra.mxu0 0.0
        %337 = vmatprep.subr.mxu0 0.0
        %338 = vmatpush1.msra.mxu0 0.0
        %339 = vmatprep.subr.mxu0 0.0
        %340 = vmatpush1.msra.mxu0 0.0
        %341 = vmatprep.subr.mxu0 0.0
        %342 = vmatpush1.msra.mxu0 0.0
        %343 = vmatprep.subr.mxu0 0.0
        %344 = vmatpush1.msra.mxu0 0.0
        %345 = vmatprep.subr.mxu0 0.0
        %346 = vmatpush1.msra.mxu0 0.0
        %347 = vmatprep.subr.mxu0 0.0
        %348 = vmatpush1.msra.mxu0 %v315
        %349 = vmatprep.subr.mxu0 0.0
        %350 = vmatpush1.msra.mxu0 %v314
        %351 = vmatprep.subr.mxu0 0.0
        %352 = vmatpush1.msra.mxu0 %v313
        %353 = vmatprep.subr.mxu0 0.0
        %354 = vmatpush1.msra.mxu0 %v312
        %355 = vmatprep.subr.mxu0 0.0
        %356 = vmatpush2.msra.mxu0 0.0
        %357 = vmatprep.subr.mxu0 0.0
        %358 = vmatpush2.msra.mxu0 0.0
        %359 = vmatprep.subr.mxu0 0.0
        %360 = vmatpush2.msra.mxu0 0.0
        %361 = vmatprep.subr.mxu0 0.0
        %362 = vmatpush2.msra.mxu0 0.0
        %363 = vmatprep.subr.mxu0 0.0
        %364 = vmatpush2.msra.mxu0 0.0
        %365 = vmatprep.subr.mxu0 0.0
        %366 = vmatpush2.msra.mxu0 0.0
        %367 = vmatprep.subr.mxu0 0.0
        %368 = vmatpush2.msra.mxu0 0.0
        %369 = vmatprep.subr.mxu0 0.0
        %370 = vmatpush2.msra.mxu0 0.0
        %371 = vmatprep.subr.mxu0 0.0
        %372 = vmatpush2.msra.mxu0 0.0
        %373 = vmatprep.subr.mxu0 0.0
        %374 = vmatpush2.msra.mxu0 0.0
        %375 = vmatprep.subr.mxu0 0.0
        %376 = vmatpush2.msra.mxu0 0.0
        %377 = vmatprep.subr.mxu0 0.0
        %378 = vmatpush2.msra.mxu0 0.0
        %379 = vmatprep.subr.mxu0 0.0
        %380 = vmatpush2.msra.mxu0 0.0
        %381 = vmatprep.subr.mxu0 0.0
        %382 = vmatpush2.msra.mxu0 0.0
        %383 = vmatprep.subr.mxu0 0.0
        %384 = vmatpush2.msra.mxu0 0.0
        %385 = vmatprep.subr.mxu0 0.0
        %386 = vmatpush2.msra.mxu0 0.0
        %387 = vmatprep.mubr.f32.mxu0 0.0
        %388 = vmatmul.mubr.f32.gmra.mxu0 %v318
        %v389 = vpop.f32.mrf.mxu0
        %v390 = vadd.f32 0.0, %v389
        %v391 = vpop.f32.mrf.mxu0
        %392 = vmatprep.mubr.f32.mxu0 0.0
        %393 = vmatmul.mubr.f32.gmra.mxu0 %v321
        %v394 = vpop.f32.mrf.mxu0
        %v395 = vadd.f32 0.0, %v394
        %v396 = vpop.f32.mrf.mxu0
        %397 = vdwg.mxu0
        %v398 = vadd.f32 %v308, %v390
        %v399 = vadd.f32 %v309, %v395
        %400 = vst.msk [vmem:[#allocation2] sm:$0xff] %vm316, %v398
        %401 = vst.msk [vmem:[#allocation2 + $0x8] sm:$0xff] %vm316, %v399
        // Predicated region
        $region45: #{tpu_custom_call.1} parent=31 // pred_check
          %p402 = pneg %p301
        $region46: #{tpu_custom_call.1} parent=31 // pred_check_branch
          %404 = sbr.rel (%p402) target = $region48
        $region47: #{tpu_custom_call.1} parent=31 // pred_region
          %v405 = vld [vmem:[#allocation2] sm:$0xff]
          %v406 = vld [vmem:[#allocation2 + $0x8] sm:$0xff]
          %v407 = vld [vmem:[%s299] sm:$0x1]
          %v409 = vlaneseq
          %v410 = vshrl.u32 %v409, 7
          %v411 = vsub.s32 0, %v410
          %v412 = vrot.slane %v407, %v411
          %v414 = vadd.f32 %v405, %v412
          %v415 = vadd.f32 %v406, %v412
          %416 = vst.msk [vmem:[%s291] sm:$0xff] %vm316, %v414
          %417 = vst.msk [vmem:[%s291 + $0x8] sm:$0xff] %vm316, %v415
        $region48: #{tpu_custom_call.1} parent=31 // pred_fallthru
          _
        %s418 = sand.u32 %s149, 1
        %s419 = scalar_lea.sflag [#allocation5], %s418
        %s420 = sand.u32 %s149, 1
        %s421 = smul.addr %s420, 16
        %s422 = scalar_lea.vmem [#allocation8], %s421
        // Predicated region
        $region49: #{tpu_custom_call.1} parent=31 // pred_check
          %p423 = pneg %p159
        $region50: #{tpu_custom_call.1} parent=31 // pred_check_branch
          %425 = sbr.rel (%p423) target = $region52
        $region51: #{tpu_custom_call.1} parent=31 // pred_region
          %s426 = smul.u32 2, %s30
          %s428 = ssub.s32 256, 256
          %429 = vsyncadd %s419, %s428
          %s430 = sadd.s32 %s31, %s426
          %s431 = smul.addr %s29, 2
          %s432 = sadd.s32 %s430, %s431
          %s433 = smul.addr %s432, 128
          %s434 = scalar_lea.hbm %s3, %s433
          %s435 = sshll.u32 %s422, 4
          %s436 = int_to_ptr.vmem [resolvable:$true] %s435
          %441 = dma.vmem_to_hbm [thread:$0]  %s436, 256, %s434, %s419, 128, 128, 8
        $region52: #{tpu_custom_call.1} parent=31 // pred_fallthru
          _
      $region32: #{tpu_custom_call.1} parent=5 // pred_fallthru
        _
      %p442 = scmp.le.s32.totalorder 2, %s18
      // Predicated region
      $region53: #{tpu_custom_call.1} parent=5 // pred_check
        %p443 = pneg %p442
      $region54: #{tpu_custom_call.1} parent=5 // pred_check_branch
        %445 = sbr.rel (%p443) target = $region56
      $region55: #{tpu_custom_call.1} parent=5 // pred_region
        %s446 = ssub.s32 %s18, 2
        // Predicated region
        $region57: #{tpu_custom_call.1} parent=55 // pred_check
          %p447 = pneg %p165
        $region58: #{tpu_custom_call.1} parent=55 // pred_check_branch
          %449 = sbr.rel (%p447) target = $region60
        $region59: #{tpu_custom_call.1} parent=55 // pred_region
          %s450 = sand.u32 %s150, 1
          %s451 = scalar_lea.sflag [#allocation5], %s450
          %s452 = sand.u32 %s150, 1
          %s453 = smul.addr %s452, 16
          %s454 = scalar_lea.vmem [#allocation8], %s453
          %455 = dma.done %s451, 256
        $region60: #{tpu_custom_call.1} parent=55 // pred_fallthru
          _
      $region56: #{tpu_custom_call.1} parent=5 // pred_fallthru
        _
    $region6: #{tpu_custom_call.1} parent=1 // loop_footer
      %s22 = sadd.s32 1, %s18
    $region7: #{tpu_custom_call.1} parent=1 // loop_footer_branch
      %17 = sbr.rel target = $region3
    $region8: #{tpu_custom_call.1} parent=1 // loop_exit
      _
    %456 = vsyncpa [#allocation4], 1
    %s457 = scalar_lea.sflag [#allocation4], 1
    %458 = vsyncpa %s457, 1
    %459 = vsyncpa [#allocation7], 1
    %s460 = scalar_lea.sflag [#allocation7], 1
    %461 = vsyncpa %s460, 1
    %462 = vsyncpa [#allocation5], 1
    %s463 = scalar_lea.sflag [#allocation5], 1
    %464 = vsyncpa %s463, 1

</llo_original>
